<compile_context>
chip_gen: v6e
topology: v6e:2x2x1
jax: 0.10.0
libtpu: 0.0.40
codegen_flags: <defaults>
</compile_context>

<pallas_src>
import math
import functools

import jax
import jax.numpy as jnp
from jax import lax
from jax.experimental import pallas as pl
from jax.experimental.pallas import tpu as pltpu


# ----------------------------- parameter setup ------------------------------

def _init_mlp_raw(key, in_dim, out_dim, width, depth):
    """PyTorch-style uniform init; returns the raw per-layer (W, b) list."""
    sizes = [(in_dim, width)] + [(width, width)] * depth + [(width, out_dim)]
    params = []
    for (fi, fo) in sizes:
        key, kw, kb = jax.random.split(key, 3)
        bound = 1.0 / math.sqrt(fi)
        w = jax.random.uniform(kw, (fi, fo), jnp.float32, -bound, bound)
        b = jax.random.uniform(kb, (fo,), jnp.float32, -bound, bound)
        params.append((w, b))
    return params


def _stack_padded(params, width, dtype):
    """Zero-pad each layer to [width, width] and stack -> [L, W, W] / [L, 1, W].

    Zero padding keeps padded lanes exactly 0 through tanh, so the padded math
    equals the un-padded PyTorch MLP.  Weights in `dtype`, biases in f32.
    """
    L = len(params)
    Ws = jnp.zeros((L, width, width), jnp.float32)
    bs = jnp.zeros((L, 1, width), jnp.float32)
    for l, (w, b) in enumerate(params):
        fi, fo = w.shape
        Ws = Ws.at[l, :fi, :fo].set(w)
        bs = bs.at[l, 0, :fo].set(b)
    return Ws.astype(dtype), bs, L


def _fold_affine(params):
    """Compose a purely-linear MLP into one affine map: y = x @ Wf + bf."""
    w0, b0 = params[0]
    Wf, bf = w0, b0
    for (w, b) in params[1:]:
        bf = bf @ w + b
        Wf = Wf @ w
    return Wf[:, 0], bf[0]          # ([in_dim], scalar) for out_dim == 1


# ------------------------------- kernel body ---------------------------------

def _mlp(h, w_ref, b_ref, num_layers, dtype):
    """Padded MLP with tanh on hidden layers; f32 accumulation, f32 output."""
    for l in range(num_layers):                         # static unrolled loop
        z = jnp.dot(h, w_ref[l], preferred_element_type=jnp.float32) + b_ref[l]
        if l < num_layers - 1:
            h = jnp.tanh(z).astype(dtype)
        else:
            h = z                                       # final layer stays f32
    return h


def _kernel_full(xl_ref, xh_ref, lw_ref, lb_ref, nw_ref, nb_ref, scal_ref,
                 out_ref, *, tile_B, Wl, Ll, Whn, Lhn, dtype):
    alpha = scal_ref[0]                                 # scalars from SMEM
    wf0, wf1, bfold = scal_ref[1], scal_ref[2], scal_ref[3]

    xl = xl_ref[...]                                    # [tile_B, 1] f32
    xh = xh_ref[...]                                    # [tile_B, 1] f32

    # -------- low path: one batched MLP over stacked [x_low; x_high] --------
    x2 = jnp.concatenate([xl, xh], axis=0)              # [2*tile_B, 1] aligned
    col_l = lax.broadcasted_iota(jnp.int32, (2 * tile_B, Wl), 1)
    h_low = jnp.where(col_l == 0, x2, 0.0).astype(dtype)
    out_low = _mlp(h_low, lw_ref, lb_ref, Ll, dtype)    # [2*tile_B, Wl] f32
    y_low = out_low[:tile_B, 0:1]                       # low_net(x_low)
    y_hbl = out_low[tile_B:, 0:1]                       # low_net(x_high)

    # -------- nonlinear high net (32-wide) -----------------------------------
    col_n = lax.broadcasted_iota(jnp.int32, (tile_B, Whn), 1)
    hin = jnp.where(col_n == 0, y_hbl,
                    jnp.where(col_n == 1, xh, 0.0)).astype(dtype)
    y_non = _mlp(hin, nw_ref, nb_ref, Lhn, dtype)[:, 0:1]

    # -------- folded linear high net: two FMAs --------------------------------
    y_lin = y_hbl * wf0 + xh * wf1 + bfold
    y_high = alpha * y_lin + (1.0 - alpha) * y_non

    # -------- lane-dense combined output slab ---------------------------------
    col_o = lax.broadcasted_iota(jnp.int32, (tile_B, 128), 1)
    out_ref[...] = jnp.where(col_o == 0, y_low,
                             jnp.where(col_o == 1, y_high, 0.0))


def _kernel_c32(xl_ref, xh_ref, nw_ref, nb_ref, scal_ref, out_ref,
                *, tile_B, Whn, Lhn, dtype):
    alpha = scal_ref[0]
    wf0, wf1, bfold = scal_ref[1], scal_ref[2], scal_ref[3]

    xl = xl_ref[...]                                    # [tile_B, 1]
    xh = xh_ref[...]

    col_n = lax.broadcasted_iota(jnp.int32, (tile_B, Whn), 1)
    hin = jnp.where(col_n == 0, xl,
                    jnp.where(col_n == 1, xh, 0.0)).astype(dtype)
    y_non = _mlp(hin, nw_ref, nb_ref, Lhn, dtype)[:, 0:1]

    y_lin = xl * wf0 + xh * wf1 + bfold
    y_high = alpha * y_lin + (1.0 - alpha) * y_non

    col_o = lax.broadcasted_iota(jnp.int32, (tile_B, 128), 1)
    out_ref[...] = jnp.where(col_o == 0, y_high, 0.0)


# --------------------------------- wrapper -----------------------------------

def _ceil_to(x, m):
    return -(-x // m) * m


class BaseMFDNNPallas:
    def __init__(self, model_structure, key, dtype=jnp.float32):
        (self.Wl, dl, self.Whl, dhl, self.Whn, dhn) = model_structure
        self.dtype = dtype
        k1, k2, k3 = jax.random.split(key, 3)
        self.low_params = _init_mlp_raw(k1, 1, 1, self.Wl, dl)
        self.hl_params = _init_mlp_raw(k2, 2, 1, self.Whl, dhl)
        self.hn_params = _init_mlp_raw(k3, 2, 1, self.Whn, dhn)
        # Nonlinear nets: zero-padded stacked weights for the kernel.
        self.low_W, self.low_b, self.Ll = _stack_padded(self.low_params, self.Wl, dtype)
        self.hn_W, self.hn_b, self.Lhn = _stack_padded(self.hn_params, self.Whn, dtype)
        # Linear high net folded offline into one affine map (2 weights + bias).
        wf, bf = _fold_affine(self.hl_params)
        self.hl_fold = jnp.concatenate([wf, bf[None]]).astype(jnp.float32)   # (3,)
        self.alpha = jnp.array([0.5], jnp.float32)       # nn.Parameter([0.5])

    def __call__(self, x_low, x_high, c32):
        B = x_low.shape[0]
        # Row tile: multiple of 8, capped at 256; pad the batch in the wrapper
        # so every sublane split is tile-aligned (slices are not views).
        tile_B = 256 if B >= 256 else _ceil_to(B, 8)
        nt = -(-B // tile_B)
        Bp = nt * tile_B
        if Bp != B:
            pad = ((0, Bp - B), (0, 0))
            x_low = jnp.pad(x_low, pad)
            x_high = jnp.pad(x_high, pad)

        scal = jnp.concatenate([self.alpha, self.hl_fold])   # (4,) f32 -> SMEM

        x_spec = pl.BlockSpec((tile_B, 1), lambda i: (i, 0))
        out_spec = pl.BlockSpec((tile_B, 128), lambda i: (i, 0))
        smem_spec = pl.BlockSpec(memory_space=pltpu.MemorySpace.SMEM)

        def resident(arr):   # weight stacks: constant index_map -> VMEM-resident
            return pl.BlockSpec(arr.shape, lambda i: (0, 0, 0))

        cparams = pltpu.CompilerParams(dimension_semantics=("parallel",))

        if c32:
            kernel = functools.partial(
                _kernel_c32, tile_B=tile_B, Whn=self.Whn, Lhn=self.Lhn,
                dtype=self.dtype)
            out = pl.pallas_call(
                kernel,
                out_shape=jax.ShapeDtypeStruct((Bp, 128), jnp.float32),
                grid=(nt,),
                in_specs=[x_spec, x_spec,
                          resident(self.hn_W), resident(self.hn_b),
                          smem_spec],
                out_specs=out_spec,
                compiler_params=cparams,
            )(x_low, x_high, self.hn_W, self.hn_b, scal)
            return out[:B, 0:1]
        else:
            kernel = functools.partial(
                _kernel_full, tile_B=tile_B, Wl=self.Wl, Ll=self.Ll,
                Whn=self.Whn, Lhn=self.Lhn, dtype=self.dtype)
            out = pl.pallas_call(
                kernel,
                out_shape=jax.ShapeDtypeStruct((Bp, 128), jnp.float32),
                grid=(nt,),
                in_specs=[x_spec, x_spec,
                          resident(self.low_W), resident(self.low_b),
                          resident(self.hn_W), resident(self.hn_b),
                          smem_spec],
                out_specs=out_spec,
                compiler_params=cparams,
            )(x_low, x_high, self.low_W, self.low_b, self.hn_W, self.hn_b, scal)
            return out[:B, 0:1], out[:B, 1:2]


# ----------------------------- pure-JAX reference ----------------------------

def _ref_mlp(x, params, nonlinear):
    h = x
    L = len(params)
    for l, (w, b) in enumerate(params):
        h = h @ w + b
        if nonlinear and l < L - 1:
            h = jnp.tanh(h)
    return h


def _ref_forward(m, x_low, x_high, c32):
    a = m.alpha[0]
    if c32:
        hin = jnp.concatenate([x_low, x_high], axis=1)
        yl = _ref_mlp(hin, m.hl_params, False)
        yn = _ref_mlp(hin, m.hn_params, True)
        return a * yl + (1 - a) * yn
    y_low = _ref_mlp(x_low, m.low_params, True)
    y_hbl = _ref_mlp(x_high, m.low_params, True)
    hin = jnp.concatenate([y_hbl, x_high], axis=1)
    yl = _ref_mlp(hin, m.hl_params, False)
    yn = _ref_mlp(hin, m.hn_params, True)
    return y_low, a * yl + (1 - a) * yn


# ----------------------------------- main -------------------------------------

if __name__ == "__main__":
    key = jax.random.PRNGKey(0)
    kx1, kx2, kparam = jax.random.split(key, 3)

    # model_structure = [lownet_width, lownet_depth, hl_width, hl_depth, hnl_width, hnl_depth]
    structure = [32, 2, 32, 2, 32, 2]
    model = BaseMFDNNPallas(structure, kparam, dtype=jnp.float32)

    B = 8
    x_low = jax.random.normal(kx1, (B, 1), jnp.float32)
    x_high = jax.random.normal(kx2, (B, 1), jnp.float32)

    # multi-fidelity branch (c32 = False): returns (y_low, y_high)
    y_low, y_high = model(x_low, x_high, c32=False)
    jax.block_until_ready((y_low, y_high))

    # single-fidelity branch (c32 = True): returns y_high only
    y_high_c32 = model(x_low, x_high, c32=True)
    jax.block_until_ready(y_high_c32)

    # verify against pure-JAX reference (built from the raw, unfolded params)
    ref_low, ref_high = _ref_forward(model, x_low, x_high, False)
    ref_high_c32 = _ref_forward(model, x_low, x_high, True)
    assert y_low.shape == (B, 1) and y_high.shape == (B, 1)
    assert jnp.allclose(y_low, ref_low, atol=1e-4, rtol=1e-4)
    assert jnp.allclose(y_high, ref_high, atol=1e-4, rtol=1e-4)
    assert jnp.allclose(y_high_c32, ref_high_c32, atol=1e-4, rtol=1e-4)

    # bf16-weights/activations variant (f32 MXU accumulation) — loose check.
    model_bf16 = BaseMFDNNPallas(structure, kparam, dtype=jnp.bfloat16)
    yl_b, yh_b = model_bf16(x_low, x_high, c32=False)
    yh_b_c32 = model_bf16(x_low, x_high, c32=True)
    jax.block_until_ready((yl_b, yh_b, yh_b_c32))
    assert jnp.allclose(yl_b, ref_low, atol=1e-1)
    assert jnp.allclose(yh_b, ref_high, atol=1e-1)
    assert jnp.allclose(yh_b_c32, ref_high_c32, atol=1e-1)

    print("KERNEL_OK")
</pallas_src>

<mosaic_0001>
module attributes {stable_mosaic.version = 11 : i64} {
  func.func @_kernel_full(%arg0: i32, %arg1: memref<8x1xf32, #tpu.memory_space<vmem>>, %arg2: memref<8x1xf32, #tpu.memory_space<vmem>>, %arg3: memref<4x32x32xf32, #tpu.memory_space<vmem>>, %arg4: memref<4x1x32xf32, #tpu.memory_space<vmem>>, %arg5: memref<4x32x32xf32, #tpu.memory_space<vmem>>, %arg6: memref<4x1x32xf32, #tpu.memory_space<vmem>>, %arg7: memref<4xf32, #tpu.memory_space<smem>>, %arg8: memref<8x128xf32, #tpu.memory_space<vmem>>) attributes {dimension_semantics = [#tpu.dimension_semantics<parallel>], iteration_bounds = array<i64: 1>, scalar_prefetch = 0 : i64, scratch_operands = 0 : i64, tpu.core_type = #tpu.core_type<tc>, window_params = [{transform_indices = @transform_0, window_bounds = array<i64: 8, 1>}, {transform_indices = @transform_1, window_bounds = array<i64: 8, 1>}, {pipeline_mode = #tpu.pipeline_mode<synchronous>, transform_indices = @transform_2, window_bounds = array<i64: 4, 32, 32>}, {pipeline_mode = #tpu.pipeline_mode<synchronous>, transform_indices = @transform_3, window_bounds = array<i64: 4, 1, 32>}, {pipeline_mode = #tpu.pipeline_mode<synchronous>, transform_indices = @transform_4, window_bounds = array<i64: 4, 32, 32>}, {pipeline_mode = #tpu.pipeline_mode<synchronous>, transform_indices = @transform_5, window_bounds = array<i64: 4, 1, 32>}, {transform_indices = @transform_6, window_bounds = array<i64: 4>}, {transform_indices = @transform_7, window_bounds = array<i64: 8, 128>}]} {
    %c0 = arith.constant 0 : index
    %0 = memref.load %arg7[%c0] : memref<4xf32, #tpu.memory_space<smem>>
    %c1 = arith.constant 1 : index
    %1 = memref.load %arg7[%c1] : memref<4xf32, #tpu.memory_space<smem>>
    %c2 = arith.constant 2 : index
    %2 = memref.load %arg7[%c2] : memref<4xf32, #tpu.memory_space<smem>>
    %c3 = arith.constant 3 : index
    %3 = memref.load %arg7[%c3] : memref<4xf32, #tpu.memory_space<smem>>
    %c0_0 = arith.constant 0 : index
    %c0_1 = arith.constant 0 : index
    %4 = vector.load %arg1[%c0_0, %c0_1] : memref<8x1xf32, #tpu.memory_space<vmem>>, vector<8x1xf32>
    %c0_2 = arith.constant 0 : index
    %c0_3 = arith.constant 0 : index
    %5 = vector.load %arg2[%c0_2, %c0_3] : memref<8x1xf32, #tpu.memory_space<vmem>>, vector<8x1xf32>
    %6 = tpu.concatenate %4, %5 in 0 : vector<8x1xf32>, vector<8x1xf32> -> vector<16x1xf32>
    %7 = tpu.iota {dimensions = array<i32: 1>} : vector<16x32xi32>
    %c0_i32 = arith.constant 0 : i32
    %8 = vector.broadcast %c0_i32 : i32 to vector<16x32xi32>
    %9 = arith.cmpi eq, %7, %8 : vector<16x32xi32>
    %cst = arith.constant 0.000000e+00 : f32
    %10 = vector.shape_cast %6 : vector<16x1xf32> to vector<16x1xf32>
    %11 = vector.broadcast %10 : vector<16x1xf32> to vector<16x32xf32>
    %12 = vector.broadcast %cst : f32 to vector<16x32xf32>
    %13 = arith.select %9, %11, %12 : vector<16x32xi1>, vector<16x32xf32>
    %c0_4 = arith.constant 0 : index
    %c0_5 = arith.constant 0 : index
    %c0_6 = arith.constant 0 : index
    %14 = vector.load %arg3[%c0_4, %c0_5, %c0_6] : memref<4x32x32xf32, #tpu.memory_space<vmem>>, vector<1x32x32xf32>
    %15 = vector.shape_cast %14 : vector<1x32x32xf32> to vector<32x32xf32>
    %cst_7 = arith.constant dense<0.000000e+00> : vector<16x32xf32>
    %16 = tpu.matmul %13, %15, %cst_7 {dimension_numbers = #tpu.dot_dimension_numbers<[1], [0], [0], [1], [0, 0, 1, 1], [], []>} : vector<16x32xf32>, vector<32x32xf32>, vector<16x32xf32> -> vector<16x32xf32>
    %c0_8 = arith.constant 0 : index
    %c0_9 = arith.constant 0 : index
    %c0_10 = arith.constant 0 : index
    %17 = vector.load %arg4[%c0_8, %c0_9, %c0_10] : memref<4x1x32xf32, #tpu.memory_space<vmem>>, vector<1x1x32xf32>
    %18 = vector.shape_cast %17 : vector<1x1x32xf32> to vector<1x32xf32>
    %19 = vector.broadcast %18 : vector<1x32xf32> to vector<16x32xf32>
    %20 = arith.addf %16, %19 : vector<16x32xf32>
    %21 = math.tanh %20 : vector<16x32xf32>
    %c1_11 = arith.constant 1 : index
    %c0_12 = arith.constant 0 : index
    %c0_13 = arith.constant 0 : index
    %22 = vector.load %arg3[%c1_11, %c0_12, %c0_13] : memref<4x32x32xf32, #tpu.memory_space<vmem>>, vector<1x32x32xf32>
    %23 = vector.shape_cast %22 : vector<1x32x32xf32> to vector<32x32xf32>
    %cst_14 = arith.constant dense<0.000000e+00> : vector<16x32xf32>
    %24 = tpu.matmul %21, %23, %cst_14 {dimension_numbers = #tpu.dot_dimension_numbers<[1], [0], [0], [1], [0, 0, 1, 1], [], []>} : vector<16x32xf32>, vector<32x32xf32>, vector<16x32xf32> -> vector<16x32xf32>
    %c1_15 = arith.constant 1 : index
    %c0_16 = arith.constant 0 : index
    %c0_17 = arith.constant 0 : index
    %25 = vector.load %arg4[%c1_15, %c0_16, %c0_17] : memref<4x1x32xf32, #tpu.memory_space<vmem>>, vector<1x1x32xf32>
    %26 = vector.shape_cast %25 : vector<1x1x32xf32> to vector<1x32xf32>
    %27 = vector.broadcast %26 : vector<1x32xf32> to vector<16x32xf32>
    %28 = arith.addf %24, %27 : vector<16x32xf32>
    %29 = math.tanh %28 : vector<16x32xf32>
    %c2_18 = arith.constant 2 : index
    %c0_19 = arith.constant 0 : index
    %c0_20 = arith.constant 0 : index
    %30 = vector.load %arg3[%c2_18, %c0_19, %c0_20] : memref<4x32x32xf32, #tpu.memory_space<vmem>>, vector<1x32x32xf32>
    %31 = vector.shape_cast %30 : vector<1x32x32xf32> to vector<32x32xf32>
    %cst_21 = arith.constant dense<0.000000e+00> : vector<16x32xf32>
    %32 = tpu.matmul %29, %31, %cst_21 {dimension_numbers = #tpu.dot_dimension_numbers<[1], [0], [0], [1], [0, 0, 1, 1], [], []>} : vector<16x32xf32>, vector<32x32xf32>, vector<16x32xf32> -> vector<16x32xf32>
    %c2_22 = arith.constant 2 : index
    %c0_23 = arith.constant 0 : index
    %c0_24 = arith.constant 0 : index
    %33 = vector.load %arg4[%c2_22, %c0_23, %c0_24] : memref<4x1x32xf32, #tpu.memory_space<vmem>>, vector<1x1x32xf32>
    %34 = vector.shape_cast %33 : vector<1x1x32xf32> to vector<1x32xf32>
    %35 = vector.broadcast %34 : vector<1x32xf32> to vector<16x32xf32>
    %36 = arith.addf %32, %35 : vector<16x32xf32>
    %37 = math.tanh %36 : vector<16x32xf32>
    %c3_25 = arith.constant 3 : index
    %c0_26 = arith.constant 0 : index
    %c0_27 = arith.constant 0 : index
    %38 = vector.load %arg3[%c3_25, %c0_26, %c0_27] : memref<4x32x32xf32, #tpu.memory_space<vmem>>, vector<1x32x32xf32>
    %39 = vector.shape_cast %38 : vector<1x32x32xf32> to vector<32x32xf32>
    %cst_28 = arith.constant dense<0.000000e+00> : vector<16x32xf32>
    %40 = tpu.matmul %37, %39, %cst_28 {dimension_numbers = #tpu.dot_dimension_numbers<[1], [0], [0], [1], [0, 0, 1, 1], [], []>} : vector<16x32xf32>, vector<32x32xf32>, vector<16x32xf32> -> vector<16x32xf32>
    %c3_29 = arith.constant 3 : index
    %c0_30 = arith.constant 0 : index
    %c0_31 = arith.constant 0 : index
    %41 = vector.load %arg4[%c3_29, %c0_30, %c0_31] : memref<4x1x32xf32, #tpu.memory_space<vmem>>, vector<1x1x32xf32>
    %42 = vector.shape_cast %41 : vector<1x1x32xf32> to vector<1x32xf32>
    %43 = vector.broadcast %42 : vector<1x32xf32> to vector<16x32xf32>
    %44 = arith.addf %40, %43 : vector<16x32xf32>
    %45 = vector.extract_strided_slice %44 {offsets = [0, 0], sizes = [8, 1], strides = [1, 1]} : vector<16x32xf32> to vector<8x1xf32>
    %46 = vector.extract_strided_slice %44 {offsets = [8, 0], sizes = [8, 1], strides = [1, 1]} : vector<16x32xf32> to vector<8x1xf32>
    %47 = tpu.iota {dimensions = array<i32: 1>} : vector<8x32xi32>
    %c0_i32_32 = arith.constant 0 : i32
    %48 = vector.broadcast %c0_i32_32 : i32 to vector<8x32xi32>
    %49 = arith.cmpi eq, %47, %48 : vector<8x32xi32>
    %c1_i32 = arith.constant 1 : i32
    %50 = vector.broadcast %c1_i32 : i32 to vector<8x32xi32>
    %51 = arith.cmpi eq, %47, %50 : vector<8x32xi32>
    %cst_33 = arith.constant 0.000000e+00 : f32
    %52 = vector.shape_cast %5 : vector<8x1xf32> to vector<8x1xf32>
    %53 = vector.broadcast %52 : vector<8x1xf32> to vector<8x32xf32>
    %54 = vector.broadcast %cst_33 : f32 to vector<8x32xf32>
    %55 = arith.select %51, %53, %54 : vector<8x32xi1>, vector<8x32xf32>
    %56 = vector.shape_cast %46 : vector<8x1xf32> to vector<8x1xf32>
    %57 = vector.broadcast %56 : vector<8x1xf32> to vector<8x32xf32>
    %58 = arith.select %49, %57, %55 : vector<8x32xi1>, vector<8x32xf32>
    %c0_34 = arith.constant 0 : index
    %c0_35 = arith.constant 0 : index
    %c0_36 = arith.constant 0 : index
    %59 = vector.load %arg5[%c0_34, %c0_35, %c0_36] : memref<4x32x32xf32, #tpu.memory_space<vmem>>, vector<1x32x32xf32>
    %60 = vector.shape_cast %59 : vector<1x32x32xf32> to vector<32x32xf32>
    %cst_37 = arith.constant dense<0.000000e+00> : vector<8x32xf32>
    %61 = tpu.matmul %58, %60, %cst_37 {dimension_numbers = #tpu.dot_dimension_numbers<[1], [0], [0], [1], [0, 0, 1, 1], [], []>} : vector<8x32xf32>, vector<32x32xf32>, vector<8x32xf32> -> vector<8x32xf32>
    %c0_38 = arith.constant 0 : index
    %c0_39 = arith.constant 0 : index
    %c0_40 = arith.constant 0 : index
    %62 = vector.load %arg6[%c0_38, %c0_39, %c0_40] : memref<4x1x32xf32, #tpu.memory_space<vmem>>, vector<1x1x32xf32>
    %63 = vector.shape_cast %62 : vector<1x1x32xf32> to vector<1x32xf32>
    %64 = vector.broadcast %63 : vector<1x32xf32> to vector<8x32xf32>
    %65 = arith.addf %61, %64 : vector<8x32xf32>
    %66 = math.tanh %65 : vector<8x32xf32>
    %c1_41 = arith.constant 1 : index
    %c0_42 = arith.constant 0 : index
    %c0_43 = arith.constant 0 : index
    %67 = vector.load %arg5[%c1_41, %c0_42, %c0_43] : memref<4x32x32xf32, #tpu.memory_space<vmem>>, vector<1x32x32xf32>
    %68 = vector.shape_cast %67 : vector<1x32x32xf32> to vector<32x32xf32>
    %cst_44 = arith.constant dense<0.000000e+00> : vector<8x32xf32>
    %69 = tpu.matmul %66, %68, %cst_44 {dimension_numbers = #tpu.dot_dimension_numbers<[1], [0], [0], [1], [0, 0, 1, 1], [], []>} : vector<8x32xf32>, vector<32x32xf32>, vector<8x32xf32> -> vector<8x32xf32>
    %c1_45 = arith.constant 1 : index
    %c0_46 = arith.constant 0 : index
    %c0_47 = arith.constant 0 : index
    %70 = vector.load %arg6[%c1_45, %c0_46, %c0_47] : memref<4x1x32xf32, #tpu.memory_space<vmem>>, vector<1x1x32xf32>
    %71 = vector.shape_cast %70 : vector<1x1x32xf32> to vector<1x32xf32>
    %72 = vector.broadcast %71 : vector<1x32xf32> to vector<8x32xf32>
    %73 = arith.addf %69, %72 : vector<8x32xf32>
    %74 = math.tanh %73 : vector<8x32xf32>
    %c2_48 = arith.constant 2 : index
    %c0_49 = arith.constant 0 : index
    %c0_50 = arith.constant 0 : index
    %75 = vector.load %arg5[%c2_48, %c0_49, %c0_50] : memref<4x32x32xf32, #tpu.memory_space<vmem>>, vector<1x32x32xf32>
    %76 = vector.shape_cast %75 : vector<1x32x32xf32> to vector<32x32xf32>
    %cst_51 = arith.constant dense<0.000000e+00> : vector<8x32xf32>
    %77 = tpu.matmul %74, %76, %cst_51 {dimension_numbers = #tpu.dot_dimension_numbers<[1], [0], [0], [1], [0, 0, 1, 1], [], []>} : vector<8x32xf32>, vector<32x32xf32>, vector<8x32xf32> -> vector<8x32xf32>
    %c2_52 = arith.constant 2 : index
    %c0_53 = arith.constant 0 : index
    %c0_54 = arith.constant 0 : index
    %78 = vector.load %arg6[%c2_52, %c0_53, %c0_54] : memref<4x1x32xf32, #tpu.memory_space<vmem>>, vector<1x1x32xf32>
    %79 = vector.shape_cast %78 : vector<1x1x32xf32> to vector<1x32xf32>
    %80 = vector.broadcast %79 : vector<1x32xf32> to vector<8x32xf32>
    %81 = arith.addf %77, %80 : vector<8x32xf32>
    %82 = math.tanh %81 : vector<8x32xf32>
    %c3_55 = arith.constant 3 : index
    %c0_56 = arith.constant 0 : index
    %c0_57 = arith.constant 0 : index
    %83 = vector.load %arg5[%c3_55, %c0_56, %c0_57] : memref<4x32x32xf32, #tpu.memory_space<vmem>>, vector<1x32x32xf32>
    %84 = vector.shape_cast %83 : vector<1x32x32xf32> to vector<32x32xf32>
    %cst_58 = arith.constant dense<0.000000e+00> : vector<8x32xf32>
    %85 = tpu.matmul %82, %84, %cst_58 {dimension_numbers = #tpu.dot_dimension_numbers<[1], [0], [0], [1], [0, 0, 1, 1], [], []>} : vector<8x32xf32>, vector<32x32xf32>, vector<8x32xf32> -> vector<8x32xf32>
    %c3_59 = arith.constant 3 : index
    %c0_60 = arith.constant 0 : index
    %c0_61 = arith.constant 0 : index
    %86 = vector.load %arg6[%c3_59, %c0_60, %c0_61] : memref<4x1x32xf32, #tpu.memory_space<vmem>>, vector<1x1x32xf32>
    %87 = vector.shape_cast %86 : vector<1x1x32xf32> to vector<1x32xf32>
    %88 = vector.broadcast %87 : vector<1x32xf32> to vector<8x32xf32>
    %89 = arith.addf %85, %88 : vector<8x32xf32>
    %90 = vector.extract_strided_slice %89 {offsets = [0, 0], sizes = [8, 1], strides = [1, 1]} : vector<8x32xf32> to vector<8x1xf32>
    %91 = vector.broadcast %1 : f32 to vector<8x1xf32>
    %92 = arith.mulf %46, %91 : vector<8x1xf32>
    %93 = vector.broadcast %2 : f32 to vector<8x1xf32>
    %94 = arith.mulf %5, %93 : vector<8x1xf32>
    %95 = arith.addf %92, %94 : vector<8x1xf32>
    %96 = vector.broadcast %3 : f32 to vector<8x1xf32>
    %97 = arith.addf %95, %96 : vector<8x1xf32>
    %98 = vector.broadcast %0 : f32 to vector<8x1xf32>
    %99 = arith.mulf %98, %97 : vector<8x1xf32>
    %cst_62 = arith.constant 1.000000e+00 : f32
    %100 = arith.subf %cst_62, %0 : f32
    %101 = vector.broadcast %100 : f32 to vector<8x1xf32>
    %102 = arith.mulf %101, %90 : vector<8x1xf32>
    %103 = arith.addf %99, %102 : vector<8x1xf32>
    %104 = tpu.iota {dimensions = array<i32: 1>} : vector<8x128xi32>
    %c0_i32_63 = arith.constant 0 : i32
    %105 = vector.broadcast %c0_i32_63 : i32 to vector<8x128xi32>
    %106 = arith.cmpi eq, %104, %105 : vector<8x128xi32>
    %c1_i32_64 = arith.constant 1 : i32
    %107 = vector.broadcast %c1_i32_64 : i32 to vector<8x128xi32>
    %108 = arith.cmpi eq, %104, %107 : vector<8x128xi32>
    %cst_65 = arith.constant 0.000000e+00 : f32
    %109 = vector.shape_cast %103 : vector<8x1xf32> to vector<8x1xf32>
    %110 = vector.broadcast %109 : vector<8x1xf32> to vector<8x128xf32>
    %111 = vector.broadcast %cst_65 : f32 to vector<8x128xf32>
    %112 = arith.select %108, %110, %111 : vector<8x128xi1>, vector<8x128xf32>
    %113 = vector.shape_cast %45 : vector<8x1xf32> to vector<8x1xf32>
    %114 = vector.broadcast %113 : vector<8x1xf32> to vector<8x128xf32>
    %115 = arith.select %106, %114, %112 : vector<8x128xi1>, vector<8x128xf32>
    %c0_66 = arith.constant 0 : index
    %c0_67 = arith.constant 0 : index
    %116 = vector.load %arg8[%c0_66, %c0_67] : memref<8x128xf32, #tpu.memory_space<vmem>>, vector<8x128xf32>
    tpu.vector_store %arg8[%c0_66, %c0_67], %115 {strides = array<i32>} : memref<8x128xf32, #tpu.memory_space<vmem>>, vector<8x128xf32>,
    return
  }
  func.func @transform_0(%arg0: i32) -> (i32, i32) {
    %c0_i32 = arith.constant 0 : i32
    %c0_i32_0 = arith.constant 0 : i32
    return %arg0, %c0_i32 : i32, i32
  }
  func.func @transform_1(%arg0: i32) -> (i32, i32) {
    %c0_i32 = arith.constant 0 : i32
    %c0_i32_0 = arith.constant 0 : i32
    return %arg0, %c0_i32 : i32, i32
  }
  func.func @transform_2(%arg0: i32) -> (i32, i32, i32) {
    %c0_i32 = arith.constant 0 : i32
    %c0_i32_0 = arith.constant 0 : i32
    %c0_i32_1 = arith.constant 0 : i32
    %c0_i32_2 = arith.constant 0 : i32
    return %c0_i32, %c0_i32_0, %c0_i32_1 : i32, i32, i32
  }
  func.func @transform_3(%arg0: i32) -> (i32, i32, i32) {
    %c0_i32 = arith.constant 0 : i32
    %c0_i32_0 = arith.constant 0 : i32
    %c0_i32_1 = arith.constant 0 : i32
    %c0_i32_2 = arith.constant 0 : i32
    return %c0_i32, %c0_i32_0, %c0_i32_1 : i32, i32, i32
  }
  func.func @transform_4(%arg0: i32) -> (i32, i32, i32) {
    %c0_i32 = arith.constant 0 : i32
    %c0_i32_0 = arith.constant 0 : i32
    %c0_i32_1 = arith.constant 0 : i32
    %c0_i32_2 = arith.constant 0 : i32
    return %c0_i32, %c0_i32_0, %c0_i32_1 : i32, i32, i32
  }
  func.func @transform_5(%arg0: i32) -> (i32, i32, i32) {
    %c0_i32 = arith.constant 0 : i32
    %c0_i32_0 = arith.constant 0 : i32
    %c0_i32_1 = arith.constant 0 : i32
    %c0_i32_2 = arith.constant 0 : i32
    return %c0_i32, %c0_i32_0, %c0_i32_1 : i32, i32, i32
  }
  func.func @transform_6(%arg0: i32) -> i32 {
    %c0_i32 = arith.constant 0 : i32
    %c0_i32_0 = arith.constant 0 : i32
    return %c0_i32 : i32
  }
  func.func @transform_7(%arg0: i32) -> (i32, i32) {
    %c0_i32 = arith.constant 0 : i32
    %c0_i32_0 = arith.constant 0 : i32
    return %arg0, %c0_i32 : i32, i32
  }
}

</mosaic_0001>

<llo_original>
// kernel: tpu_custom_call.1
$region0: #{tpu_custom_call.1}
  #allocation0 [shape = 'u32[]', space=smem, size = 0x4, offset = 0x4, fixed_abs, tag = 'smem constant byte address 0x4 - core index']
  #allocation1 [shape = 'u32[144,128]{1,0:T(1,128)}', space=vmem, size = 0x12000, scoped, tag = 'internal scratch']
  %s0 = inlined_call_operand.vmem [shape: f32[8,1], index: 0, kind: input, shape index: {}]
  %s1 = inlined_call_operand.vmem [shape: f32[8,1], index: 1, kind: input, shape index: {}]
  %s2 = inlined_call_operand.hbm [shape: f32[4,32,32], index: 2, kind: input, shape index: {}]
  %s3 = inlined_call_operand.vmem [shape: f32[4,1,32], index: 3, kind: input, shape index: {}]
  %s4 = inlined_call_operand.hbm [shape: f32[4,32,32], index: 4, kind: input, shape index: {}]
  %s5 = inlined_call_operand.vmem [shape: f32[4,1,32], index: 5, kind: input, shape index: {}]
  %s6 = inlined_call_operand.vmem [shape: f32[4], index: 6, kind: input, shape index: {}]
  %s7 = inlined_call_operand.hbm [shape: f32[8,128], index: 7, kind: output, shape index: {}]
  %s8 = sld [smem:[#allocation0]]
  $region50: #{tpu_custom_call.1} parent=0
    _
  %s10 = ssub.s32 1, %s8
  %s11 = scalar_select 0, %s10, %s8
  $region1: #{tpu_custom_call.1} parent=0
    #allocation2 [shape = 'u8[65536]{0}', space=vmem, size = 0x10000, scoped, tag = 'input window, operand 2, single buffered']
    #allocation3 [shape = 's32[1]{0}', space=sflag, size = 0x4, scoped, tag = 'scoped memory for tpu_custom_call.1']
    #allocation4 [shape = 's32[1]{0}', space=sflag, size = 0x4, scoped, tag = 'scoped memory for tpu_custom_call.1']
    #allocation5 [shape = 's32[1]{0}', space=sflag, size = 0x4, scoped, tag = 'scoped memory for tpu_custom_call.1']
    #allocation6 [shape = 'u8[65536]{0}', space=vmem, size = 0x10000, scoped, tag = 'input window, operand 4, single buffered']
    #allocation7 [shape = 's32[1]{0}', space=sflag, size = 0x4, scoped, tag = 'scoped memory for tpu_custom_call.1']
    #allocation8 [shape = 'u8[512]{0}', space=smem, size = 0x200, scoped, tag = 'input window, operand 6, single buffered']
    #allocation9 [shape = 'u8[4096]{0}', space=vmem, size = 0x1000, scoped, tag = 'output window, operand 0, single buffered']
    %12 = vsyncpa [#allocation3], 0
    %13 = vsyncpa [#allocation7], 0
    %14 = vsyncpa [#allocation5], 0
    %15 = vsyncpa [#allocation4], 0
    // Predicated region
    $region2: #{tpu_custom_call.1} parent=1 // pred_check
      _
    $region3: #{tpu_custom_call.1} parent=1 // pred_check_branch
      %17 = sbr.rel (0) target = $region5
    $region4: #{tpu_custom_call.1} parent=1 // pred_region
      _
    $region5: #{tpu_custom_call.1} parent=1 // pred_fallthru
      _
    // Predicated region
    $region6: #{tpu_custom_call.1} parent=1 // pred_check
      _
    $region7: #{tpu_custom_call.1} parent=1 // pred_check_branch
      %19 = sbr.rel (0) target = $region9
    $region8: #{tpu_custom_call.1} parent=1 // pred_region
      _
    $region9: #{tpu_custom_call.1} parent=1 // pred_fallthru
      _
    // Predicated region
    $region10: #{tpu_custom_call.1} parent=1 // pred_check
      _
    $region11: #{tpu_custom_call.1} parent=1 // pred_check_branch
      %21 = sbr.rel (0) target = $region13
    $region12: #{tpu_custom_call.1} parent=1 // pred_region
      %s23 = ssub.s32 2048, 2048
      %24 = vsyncadd [#allocation3], %s23
      %s25 = sshll.u32 [#allocation2], 4
      %s26 = int_to_ptr.vmem [resolvable:$true] %s25
      %31 = dma.hbm_to_vmem [thread:$0]  %s2, 2048, %s26, [#allocation3], 128, 128, 8
    $region13: #{tpu_custom_call.1} parent=1 // pred_fallthru
      _
    // Predicated region
    $region14: #{tpu_custom_call.1} parent=1 // pred_check
      _
    $region15: #{tpu_custom_call.1} parent=1 // pred_check_branch
      %33 = sbr.rel (0) target = $region17
    $region16: #{tpu_custom_call.1} parent=1 // pred_region
      _
    $region17: #{tpu_custom_call.1} parent=1 // pred_fallthru
      _
    // Predicated region
    $region18: #{tpu_custom_call.1} parent=1 // pred_check
      _
    $region19: #{tpu_custom_call.1} parent=1 // pred_check_branch
      %35 = sbr.rel (0) target = $region21
    $region20: #{tpu_custom_call.1} parent=1 // pred_region
      %s37 = ssub.s32 2048, 2048
      %38 = vsyncadd [#allocation7], %s37
      %s39 = sshll.u32 [#allocation6], 4
      %s40 = int_to_ptr.vmem [resolvable:$true] %s39
      %45 = dma.hbm_to_vmem [thread:$0]  %s4, 2048, %s40, [#allocation7], 128, 128, 8
    $region21: #{tpu_custom_call.1} parent=1 // pred_fallthru
      _
    // Predicated region
    $region22: #{tpu_custom_call.1} parent=1 // pred_check
      _
    $region23: #{tpu_custom_call.1} parent=1 // pred_check_branch
      %47 = sbr.rel (0) target = $region25
    $region24: #{tpu_custom_call.1} parent=1 // pred_region
      _
    $region25: #{tpu_custom_call.1} parent=1 // pred_fallthru
      _
    // Predicated region
    $region26: #{tpu_custom_call.1} parent=1 // pred_check
      _
    $region27: #{tpu_custom_call.1} parent=1 // pred_check_branch
      %49 = sbr.rel (0) target = $region29
    $region28: #{tpu_custom_call.1} parent=1 // pred_region
      %s51 = ssub.s32 16, 16
      %52 = vsyncadd [#allocation5], %s51
      %s54 = sshll.u32 %s6, 4
      %s55 = int_to_ptr.vmem [resolvable:$true] %s54
      %57 = dma.vmem_to_smem %s55, 16, [#allocation8], [#allocation5]
    $region29: #{tpu_custom_call.1} parent=1 // pred_fallthru
      _
    // Predicated region
    $region30: #{tpu_custom_call.1} parent=1 // pred_check
      _
    $region31: #{tpu_custom_call.1} parent=1 // pred_check_branch
      %59 = sbr.rel (0) target = $region33
    $region32: #{tpu_custom_call.1} parent=1 // pred_region
      %60 = dma.done [#allocation3], 2048
    $region33: #{tpu_custom_call.1} parent=1 // pred_fallthru
      _
    // Predicated region
    $region34: #{tpu_custom_call.1} parent=1 // pred_check
      _
    $region35: #{tpu_custom_call.1} parent=1 // pred_check_branch
      %62 = sbr.rel (0) target = $region37
    $region36: #{tpu_custom_call.1} parent=1 // pred_region
      %63 = dma.done [#allocation7], 2048
    $region37: #{tpu_custom_call.1} parent=1 // pred_fallthru
      _
    // Predicated region
    $region38: #{tpu_custom_call.1} parent=1 // pred_check
      _
    $region39: #{tpu_custom_call.1} parent=1 // pred_check_branch
      %65 = sbr.rel (0) target = $region41
    $region40: #{tpu_custom_call.1} parent=1 // pred_region
      %66 = dma.done [#allocation5], 16
    $region41: #{tpu_custom_call.1} parent=1 // pred_fallthru
      _
    %67 = sfence
    %s68 = sld [smem:[#allocation8]]
    %s69 = sld [smem:[#allocation8 + $0x1]]
    %s70 = sld [smem:[#allocation8 + $0x2]]
    %s71 = sld [smem:[#allocation8 + $0x3]]
    %v72 = vld [vmem:[%s0] sm:$0xff]
    %v73 = vld [vmem:[%s1] sm:$0xff]
    %v74 = vlaneseq
    %v75 = vand.u32 %v74, 127
    %vm76 = vcmp.eq.s32.totalorder %v75, 0
    %78 = vset.pattern.permute.xlu0 0
    %79 = vperm.xlu0 %78, %v72
    %v80 = vpop.permute.xlu0 %79
    %83 = vset.pattern.permute.xlu0 0
    %84 = vperm.xlu0 %83, %v73
    %v85 = vpop.permute.xlu0 %84
    %v87 = vsel %vm76, %v80, 0.0
    %v88 = vsel %vm76, %v85, 0.0
    %v89 = vld [vmem:[#allocation2] sm:$0xff]
    %v90 = vld [vmem:[#allocation2 + $0x8] sm:$0xff]
    %v91 = vld [vmem:[#allocation2 + $0x10] sm:$0xff]
    %v92 = vld [vmem:[#allocation2 + $0x18] sm:$0xff]
    %v93 = vld [vmem:[%s3] sm:$0x1]
    %v95 = vlaneseq
    %v96 = vshrl.u32 %v95, 7
    %v97 = vsub.s32 0, %v96
    %v98 = vrot.slane %v93, %v97
    %vm100 = vcmask 261120
    %v102 = vsel %vm100, %v87, 0
    %v105 = vsel %vm100, %v88, 0
    %107 = vmatprep.subr.mxu0 0.0
    %108 = vmatpush1.msra.mxu0 0.0
    %109 = vmatprep.subr.mxu0 0.0
    %110 = vmatpush1.msra.mxu0 0.0
    %111 = vmatprep.subr.mxu0 0.0
    %112 = vmatpush1.msra.mxu0 0.0
    %113 = vmatprep.subr.mxu0 0.0
    %114 = vmatpush1.msra.mxu0 0.0
    %115 = vmatprep.subr.mxu0 0.0
    %116 = vmatpush1.msra.mxu0 0.0
    %117 = vmatprep.subr.mxu0 0.0
    %118 = vmatpush1.msra.mxu0 0.0
    %119 = vmatprep.subr.mxu0 0.0
    %120 = vmatpush1.msra.mxu0 0.0
    %121 = vmatprep.subr.mxu0 0.0
    %122 = vmatpush1.msra.mxu0 0.0
    %123 = vmatprep.subr.mxu0 0.0
    %124 = vmatpush1.msra.mxu0 0.0
    %125 = vmatprep.subr.mxu0 0.0
    %126 = vmatpush1.msra.mxu0 0.0
    %127 = vmatprep.subr.mxu0 0.0
    %128 = vmatpush1.msra.mxu0 0.0
    %129 = vmatprep.subr.mxu0 0.0
    %130 = vmatpush1.msra.mxu0 0.0
    %131 = vmatprep.subr.mxu0 0.0
    %132 = vmatpush1.msra.mxu0 %v92
    %133 = vmatprep.subr.mxu0 0.0
    %134 = vmatpush1.msra.mxu0 %v91
    %135 = vmatprep.subr.mxu0 0.0
    %136 = vmatpush1.msra.mxu0 %v90
    %137 = vmatprep.subr.mxu0 0.0
    %138 = vmatpush1.msra.mxu0 %v89
    %139 = vmatprep.subr.mxu0 0.0
    %140 = vmatpush2.msra.mxu0 0.0
    %141 = vmatprep.subr.mxu0 0.0
    %142 = vmatpush2.msra.mxu0 0.0
    %143 = vmatprep.subr.mxu0 0.0
    %144 = vmatpush2.msra.mxu0 0.0
    %145 = vmatprep.subr.mxu0 0.0
    %146 = vmatpush2.msra.mxu0 0.0
    %147 = vmatprep.subr.mxu0 0.0
    %148 = vmatpush2.msra.mxu0 0.0
    %149 = vmatprep.subr.mxu0 0.0
    %150 = vmatpush2.msra.mxu0 0.0
    %151 = vmatprep.subr.mxu0 0.0
    %152 = vmatpush2.msra.mxu0 0.0
    %153 = vmatprep.subr.mxu0 0.0
    %154 = vmatpush2.msra.mxu0 0.0
    %155 = vmatprep.subr.mxu0 0.0
    %156 = vmatpush2.msra.mxu0 0.0
    %157 = vmatprep.subr.mxu0 0.0
    %158 = vmatpush2.msra.mxu0 0.0
    %159 = vmatprep.subr.mxu0 0.0
    %160 = vmatpush2.msra.mxu0 0.0
    %161 = vmatprep.subr.mxu0 0.0
    %162 = vmatpush2.msra.mxu0 0.0
    %163 = vmatprep.subr.mxu0 0.0
    %164 = vmatpush2.msra.mxu0 0.0
    %165 = vmatprep.subr.mxu0 0.0
    %166 = vmatpush2.msra.mxu0 0.0
    %167 = vmatprep.subr.mxu0 0.0
    %168 = vmatpush2.msra.mxu0 0.0
    %169 = vmatprep.subr.mxu0 0.0
    %170 = vmatpush2.msra.mxu0 0.0
    %171 = vmatprep.mubr.f32.mxu0 0.0
    %172 = vmatmul.mubr.f32.gmra.mxu0 %v102
    %v173 = vpop.f32.mrf.mxu0
    %v174 = vadd.f32 %v98, %v173
    %v175 = vpop.f32.mrf.mxu0
    %176 = vmatprep.mubr.f32.mxu0 0.0
    %177 = vmatmul.mubr.f32.gmra.mxu0 %v105
    %v178 = vpop.f32.mrf.mxu0
    %v179 = vadd.f32 %v98, %v178
    %v180 = vpop.f32.mrf.mxu0
    %181 = vdwg.mxu0
    %v182 = vtanh.pop %v174
    %v183 = vtanh.pop %v179
    %s184 = scalar_lea.vmem [#allocation2], 32
    %v185 = vld [vmem:[%s184] sm:$0xff]
    %v186 = vld [vmem:[%s184 + $0x8] sm:$0xff]
    %v187 = vld [vmem:[%s184 + $0x10] sm:$0xff]
    %v188 = vld [vmem:[%s184 + $0x18] sm:$0xff]
    %s189 = scalar_lea.vmem %s3, 1
    %v190 = vld [vmem:[%s189] sm:$0x1]
    %v192 = vlaneseq
    %v193 = vshrl.u32 %v192, 7
    %v194 = vsub.s32 0, %v193
    %v195 = vrot.slane %v190, %v194
    %v198 = vsel %vm100, %v182, 0
    %v201 = vsel %vm100, %v183, 0
    %203 = vmatprep.subr.mxu0 0.0
    %204 = vmatpush1.msra.mxu0 0.0
    %205 = vmatprep.subr.mxu0 0.0
    %206 = vmatpush1.msra.mxu0 0.0
    %207 = vmatprep.subr.mxu0 0.0
    %208 = vmatpush1.msra.mxu0 0.0
    %209 = vmatprep.subr.mxu0 0.0
    %210 = vmatpush1.msra.mxu0 0.0
    %211 = vmatprep.subr.mxu0 0.0
    %212 = vmatpush1.msra.mxu0 0.0
    %213 = vmatprep.subr.mxu0 0.0
    %214 = vmatpush1.msra.mxu0 0.0
    %215 = vmatprep.subr.mxu0 0.0
    %216 = vmatpush1.msra.mxu0 0.0
    %217 = vmatprep.subr.mxu0 0.0
    %218 = vmatpush1.msra.mxu0 0.0
    %219 = vmatprep.subr.mxu0 0.0
    %220 = vmatpush1.msra.mxu0 0.0
    %221 = vmatprep.subr.mxu0 0.0
    %222 = vmatpush1.msra.mxu0 0.0
    %223 = vmatprep.subr.mxu0 0.0
    %224 = vmatpush1.msra.mxu0 0.0
    %225 = vmatprep.subr.mxu0 0.0
    %226 = vmatpush1.msra.mxu0 0.0
    %227 = vmatprep.subr.mxu0 0.0
    %228 = vmatpush1.msra.mxu0 %v188
    %229 = vmatprep.subr.mxu0 0.0
    %230 = vmatpush1.msra.mxu0 %v187
    %231 = vmatprep.subr.mxu0 0.0
    %232 = vmatpush1.msra.mxu0 %v186
    %233 = vmatprep.subr.mxu0 0.0
    %234 = vmatpush1.msra.mxu0 %v185
    %235 = vmatprep.subr.mxu0 0.0
    %236 = vmatpush2.msra.mxu0 0.0
    %237 = vmatprep.subr.mxu0 0.0
    %238 = vmatpush2.msra.mxu0 0.0
    %239 = vmatprep.subr.mxu0 0.0
    %240 = vmatpush2.msra.mxu0 0.0
    %241 = vmatprep.subr.mxu0 0.0
    %242 = vmatpush2.msra.mxu0 0.0
    %243 = vmatprep.subr.mxu0 0.0
    %244 = vmatpush2.msra.mxu0 0.0
    %245 = vmatprep.subr.mxu0 0.0
    %246 = vmatpush2.msra.mxu0 0.0
    %247 = vmatprep.subr.mxu0 0.0
    %248 = vmatpush2.msra.mxu0 0.0
    %249 = vmatprep.subr.mxu0 0.0
    %250 = vmatpush2.msra.mxu0 0.0
    %251 = vmatprep.subr.mxu0 0.0
    %252 = vmatpush2.msra.mxu0 0.0
    %253 = vmatprep.subr.mxu0 0.0
    %254 = vmatpush2.msra.mxu0 0.0
    %255 = vmatprep.subr.mxu0 0.0
    %256 = vmatpush2.msra.mxu0 0.0
    %257 = vmatprep.subr.mxu0 0.0
    %258 = vmatpush2.msra.mxu0 0.0
    %259 = vmatprep.subr.mxu0 0.0
    %260 = vmatpush2.msra.mxu0 0.0
    %261 = vmatprep.subr.mxu0 0.0
    %262 = vmatpush2.msra.mxu0 0.0
    %263 = vmatprep.subr.mxu0 0.0
    %264 = vmatpush2.msra.mxu0 0.0
    %265 = vmatprep.subr.mxu0 0.0
    %266 = vmatpush2.msra.mxu0 0.0
    %267 = vmatprep.mubr.f32.mxu0 0.0
    %268 = vmatmul.mubr.f32.gmra.mxu0 %v198
    %v269 = vpop.f32.mrf.mxu0
    %v270 = vadd.f32 %v195, %v269
    %v271 = vpop.f32.mrf.mxu0
    %272 = vmatprep.mubr.f32.mxu0 0.0
    %273 = vmatmul.mubr.f32.gmra.mxu0 %v201
    %v274 = vpop.f32.mrf.mxu0
    %v275 = vadd.f32 %v195, %v274
    %v276 = vpop.f32.mrf.mxu0
    %277 = vdwg.mxu0
    %v278 = vtanh.pop %v270
    %v279 = vtanh.pop %v275
    %s280 = scalar_lea.vmem [#allocation2], 64
    %v281 = vld [vmem:[%s280] sm:$0xff]
    %v282 = vld [vmem:[%s280 + $0x8] sm:$0xff]
    %v283 = vld [vmem:[%s280 + $0x10] sm:$0xff]
    %v284 = vld [vmem:[%s280 + $0x18] sm:$0xff]
    %s285 = scalar_lea.vmem %s3, 2
    %v286 = vld [vmem:[%s285] sm:$0x1]
    %v288 = vlaneseq
    %v289 = vshrl.u32 %v288, 7
    %v290 = vsub.s32 0, %v289
    %v291 = vrot.slane %v286, %v290
    %v294 = vsel %vm100, %v278, 0
    %v297 = vsel %vm100, %v279, 0
    %299 = vmatprep.subr.mxu0 0.0
    %300 = vmatpush1.msra.mxu0 0.0
    %301 = vmatprep.subr.mxu0 0.0
    %302 = vmatpush1.msra.mxu0 0.0
    %303 = vmatprep.subr.mxu0 0.0
    %304 = vmatpush1.msra.mxu0 0.0
    %305 = vmatprep.subr.mxu0 0.0
    %306 = vmatpush1.msra.mxu0 0.0
    %307 = vmatprep.subr.mxu0 0.0
    %308 = vmatpush1.msra.mxu0 0.0
    %309 = vmatprep.subr.mxu0 0.0
    %310 = vmatpush1.msra.mxu0 0.0
    %311 = vmatprep.subr.mxu0 0.0
    %312 = vmatpush1.msra.mxu0 0.0
    %313 = vmatprep.subr.mxu0 0.0
    %314 = vmatpush1.msra.mxu0 0.0
    %315 = vmatprep.subr.mxu0 0.0
    %316 = vmatpush1.msra.mxu0 0.0
    %317 = vmatprep.subr.mxu0 0.0
    %318 = vmatpush1.msra.mxu0 0.0
    %319 = vmatprep.subr.mxu0 0.0
    %320 = vmatpush1.msra.mxu0 0.0
    %321 = vmatprep.subr.mxu0 0.0
    %322 = vmatpush1.msra.mxu0 0.0
    %323 = vmatprep.subr.mxu0 0.0
    %324 = vmatpush1.msra.mxu0 %v284
    %325 = vmatprep.subr.mxu0 0.0
    %326 = vmatpush1.msra.mxu0 %v283
    %327 = vmatprep.subr.mxu0 0.0
    %328 = vmatpush1.msra.mxu0 %v282
    %329 = vmatprep.subr.mxu0 0.0
    %330 = vmatpush1.msra.mxu0 %v281
    %331 = vmatprep.subr.mxu0 0.0
    %332 = vmatpush2.msra.mxu0 0.0
    %333 = vmatprep.subr.mxu0 0.0
    %334 = vmatpush2.msra.mxu0 0.0
    %335 = vmatprep.subr.mxu0 0.0
    %336 = vmatpush2.msra.mxu0 0.0
    %337 = vmatprep.subr.mxu0 0.0
    %338 = vmatpush2.msra.mxu0 0.0
    %339 = vmatprep.subr.mxu0 0.0
    %340 = vmatpush2.msra.mxu0 0.0
    %341 = vmatprep.subr.mxu0 0.0
    %342 = vmatpush2.msra.mxu0 0.0
    %343 = vmatprep.subr.mxu0 0.0
    %344 = vmatpush2.msra.mxu0 0.0
    %345 = vmatprep.subr.mxu0 0.0
    %346 = vmatpush2.msra.mxu0 0.0
    %347 = vmatprep.subr.mxu0 0.0
    %348 = vmatpush2.msra.mxu0 0.0
    %349 = vmatprep.subr.mxu0 0.0
    %350 = vmatpush2.msra.mxu0 0.0
    %351 = vmatprep.subr.mxu0 0.0
    %352 = vmatpush2.msra.mxu0 0.0
    %353 = vmatprep.subr.mxu0 0.0
    %354 = vmatpush2.msra.mxu0 0.0
    %355 = vmatprep.subr.mxu0 0.0
    %356 = vmatpush2.msra.mxu0 0.0
    %357 = vmatprep.subr.mxu0 0.0
    %358 = vmatpush2.msra.mxu0 0.0
    %359 = vmatprep.subr.mxu0 0.0
    %360 = vmatpush2.msra.mxu0 0.0
    %361 = vmatprep.subr.mxu0 0.0
    %362 = vmatpush2.msra.mxu0 0.0
    %363 = vmatprep.mubr.f32.mxu0 0.0
    %364 = vmatmul.mubr.f32.gmra.mxu0 %v294
    %v365 = vpop.f32.mrf.mxu0
    %v366 = vadd.f32 %v291, %v365
    %v367 = vpop.f32.mrf.mxu0
    %368 = vmatprep.mubr.f32.mxu0 0.0
    %369 = vmatmul.mubr.f32.gmra.mxu0 %v297
    %v370 = vpop.f32.mrf.mxu0
    %v371 = vadd.f32 %v291, %v370
    %v372 = vpop.f32.mrf.mxu0
    %373 = vdwg.mxu0
    %v374 = vtanh.pop %v366
    %v375 = vtanh.pop %v371
    %s376 = scalar_lea.vmem [#allocation2], 96
    %v377 = vld [vmem:[%s376] sm:$0xff]
    %v378 = vld [vmem:[%s376 + $0x8] sm:$0xff]
    %v379 = vld [vmem:[%s376 + $0x10] sm:$0xff]
    %v380 = vld [vmem:[%s376 + $0x18] sm:$0xff]
    %s381 = scalar_lea.vmem %s3, 3
    %v382 = vld [vmem:[%s381] sm:$0x1]
    %v384 = vlaneseq
    %v385 = vshrl.u32 %v384, 7
    %v386 = vsub.s32 0, %v385
    %v387 = vrot.slane %v382, %v386
    %v390 = vsel %vm100, %v374, 0
    %v393 = vsel %vm100, %v375, 0
    %395 = vmatprep.subr.mxu0 0.0
    %396 = vmatpush1.msra.mxu0 0.0
    %397 = vmatprep.subr.mxu0 0.0
    %398 = vmatpush1.msra.mxu0 0.0
    %399 = vmatprep.subr.mxu0 0.0
    %400 = vmatpush1.msra.mxu0 0.0
    %401 = vmatprep.subr.mxu0 0.0
    %402 = vmatpush1.msra.mxu0 0.0
    %403 = vmatprep.subr.mxu0 0.0
    %404 = vmatpush1.msra.mxu0 0.0
    %405 = vmatprep.subr.mxu0 0.0
    %406 = vmatpush1.msra.mxu0 0.0
    %407 = vmatprep.subr.mxu0 0.0
    %408 = vmatpush1.msra.mxu0 0.0
    %409 = vmatprep.subr.mxu0 0.0
    %410 = vmatpush1.msra.mxu0 0.0
    %411 = vmatprep.subr.mxu0 0.0
    %412 = vmatpush1.msra.mxu0 0.0
    %413 = vmatprep.subr.mxu0 0.0
    %414 = vmatpush1.msra.mxu0 0.0
    %415 = vmatprep.subr.mxu0 0.0
    %416 = vmatpush1.msra.mxu0 0.0
    %417 = vmatprep.subr.mxu0 0.0
    %418 = vmatpush1.msra.mxu0 0.0
    %419 = vmatprep.subr.mxu0 0.0
    %420 = vmatpush1.msra.mxu0 %v380
    %421 = vmatprep.subr.mxu0 0.0
    %422 = vmatpush1.msra.mxu0 %v379
    %423 = vmatprep.subr.mxu0 0.0
    %424 = vmatpush1.msra.mxu0 %v378
    %425 = vmatprep.subr.mxu0 0.0
    %426 = vmatpush1.msra.mxu0 %v377
    %427 = vmatprep.subr.mxu0 0.0
    %428 = vmatpush2.msra.mxu0 0.0
    %429 = vmatprep.subr.mxu0 0.0
    %430 = vmatpush2.msra.mxu0 0.0
    %431 = vmatprep.subr.mxu0 0.0
    %432 = vmatpush2.msra.mxu0 0.0
    %433 = vmatprep.subr.mxu0 0.0
    %434 = vmatpush2.msra.mxu0 0.0
    %435 = vmatprep.subr.mxu0 0.0
    %436 = vmatpush2.msra.mxu0 0.0
    %437 = vmatprep.subr.mxu0 0.0
    %438 = vmatpush2.msra.mxu0 0.0
    %439 = vmatprep.subr.mxu0 0.0
    %440 = vmatpush2.msra.mxu0 0.0
    %441 = vmatprep.subr.mxu0 0.0
    %442 = vmatpush2.msra.mxu0 0.0
    %443 = vmatprep.subr.mxu0 0.0
    %444 = vmatpush2.msra.mxu0 0.0
    %445 = vmatprep.subr.mxu0 0.0
    %446 = vmatpush2.msra.mxu0 0.0
    %447 = vmatprep.subr.mxu0 0.0
    %448 = vmatpush2.msra.mxu0 0.0
    %449 = vmatprep.subr.mxu0 0.0
    %450 = vmatpush2.msra.mxu0 0.0
    %451 = vmatprep.subr.mxu0 0.0
    %452 = vmatpush2.msra.mxu0 0.0
    %453 = vmatprep.subr.mxu0 0.0
    %454 = vmatpush2.msra.mxu0 0.0
    %455 = vmatprep.subr.mxu0 0.0
    %456 = vmatpush2.msra.mxu0 0.0
    %457 = vmatprep.subr.mxu0 0.0
    %458 = vmatpush2.msra.mxu0 0.0
    %459 = vmatprep.mubr.f32.mxu0 0.0
    %460 = vmatmul.mubr.f32.gmra.mxu0 %v390
    %v461 = vpop.f32.mrf.mxu0
    %v462 = vadd.f32 %v387, %v461
    %v463 = vpop.f32.mrf.mxu0
    %464 = vmatprep.mubr.f32.mxu0 0.0
    %465 = vmatmul.mubr.f32.gmra.mxu0 %v393
    %v466 = vpop.f32.mrf.mxu0
    %v467 = vadd.f32 %v387, %v466
    %v468 = vpop.f32.mrf.mxu0
    %469 = vdwg.mxu0
    %vm470 = vcmp.eq.s32.totalorder %v75, 1
    %v471 = vsel %vm470, %v85, 0.0
    %473 = vset.pattern.permute.xlu0 0
    %474 = vperm.xlu0 %473, %v467
    %v475 = vpop.permute.xlu0 %474
    %v477 = vsel %vm76, %v475, %v471
    %v478 = vld [vmem:[#allocation6] sm:$0xff]
    %v479 = vld [vmem:[#allocation6 + $0x8] sm:$0xff]
    %v480 = vld [vmem:[#allocation6 + $0x10] sm:$0xff]
    %v481 = vld [vmem:[#allocation6 + $0x18] sm:$0xff]
    %v482 = vld [vmem:[%s5] sm:$0x1]
    %v484 = vlaneseq
    %v485 = vshrl.u32 %v484, 7
    %v486 = vsub.s32 0, %v485
    %v487 = vrot.slane %v482, %v486
    %v490 = vsel %vm100, %v477, 0
    %492 = vmatprep.subr.mxu0 0.0
    %493 = vmatpush1.msra.mxu0 0.0
    %494 = vmatprep.subr.mxu0 0.0
    %495 = vmatpush1.msra.mxu0 0.0
    %496 = vmatprep.subr.mxu0 0.0
    %497 = vmatpush1.msra.mxu0 0.0
    %498 = vmatprep.subr.mxu0 0.0
    %499 = vmatpush1.msra.mxu0 0.0
    %500 = vmatprep.subr.mxu0 0.0
    %501 = vmatpush1.msra.mxu0 0.0
    %502 = vmatprep.subr.mxu0 0.0
    %503 = vmatpush1.msra.mxu0 0.0
    %504 = vmatprep.subr.mxu0 0.0
    %505 = vmatpush1.msra.mxu0 0.0
    %506 = vmatprep.subr.mxu0 0.0
    %507 = vmatpush1.msra.mxu0 0.0
    %508 = vmatprep.subr.mxu0 0.0
    %509 = vmatpush1.msra.mxu0 0.0
    %510 = vmatprep.subr.mxu0 0.0
    %511 = vmatpush1.msra.mxu0 0.0
    %512 = vmatprep.subr.mxu0 0.0
    %513 = vmatpush1.msra.mxu0 0.0
    %514 = vmatprep.subr.mxu0 0.0
    %515 = vmatpush1.msra.mxu0 0.0
    %516 = vmatprep.subr.mxu0 0.0
    %517 = vmatpush1.msra.mxu0 %v481
    %518 = vmatprep.subr.mxu0 0.0
    %519 = vmatpush1.msra.mxu0 %v480
    %520 = vmatprep.subr.mxu0 0.0
    %521 = vmatpush1.msra.mxu0 %v479
    %522 = vmatprep.subr.mxu0 0.0
    %523 = vmatpush1.msra.mxu0 %v478
    %524 = vmatprep.subr.mxu0 0.0
    %525 = vmatpush2.msra.mxu0 0.0
    %526 = vmatprep.subr.mxu0 0.0
    %527 = vmatpush2.msra.mxu0 0.0
    %528 = vmatprep.subr.mxu0 0.0
    %529 = vmatpush2.msra.mxu0 0.0
    %530 = vmatprep.subr.mxu0 0.0
    %531 = vmatpush2.msra.mxu0 0.0
    %532 = vmatprep.subr.mxu0 0.0
    %533 = vmatpush2.msra.mxu0 0.0
    %534 = vmatprep.subr.mxu0 0.0
    %535 = vmatpush2.msra.mxu0 0.0
    %536 = vmatprep.subr.mxu0 0.0
    %537 = vmatpush2.msra.mxu0 0.0
    %538 = vmatprep.subr.mxu0 0.0
    %539 = vmatpush2.msra.mxu0 0.0
    %540 = vmatprep.subr.mxu0 0.0
    %541 = vmatpush2.msra.mxu0 0.0
    %542 = vmatprep.subr.mxu0 0.0
    %543 = vmatpush2.msra.mxu0 0.0
    %544 = vmatprep.subr.mxu0 0.0
    %545 = vmatpush2.msra.mxu0 0.0
    %546 = vmatprep.subr.mxu0 0.0
    %547 = vmatpush2.msra.mxu0 0.0
    %548 = vmatprep.subr.mxu0 0.0
    %549 = vmatpush2.msra.mxu0 0.0
    %550 = vmatprep.subr.mxu0 0.0
    %551 = vmatpush2.msra.mxu0 0.0
    %552 = vmatprep.subr.mxu0 0.0
    %553 = vmatpush2.msra.mxu0 0.0
    %554 = vmatprep.subr.mxu0 0.0
    %555 = vmatpush2.msra.mxu0 0.0
    %556 = vmatprep.mubr.f32.mxu0 0.0
    %557 = vmatmul.mubr.f32.gmra.mxu0 %v490
    %v558 = vpop.f32.mrf.mxu0
    %v559 = vadd.f32 %v487, %v558
    %v560 = vpop.f32.mrf.mxu0
    %561 = vdwg.mxu0
    %v562 = vtanh.pop %v559
    %s563 = scalar_lea.vmem [#allocation6], 32
    %v564 = vld [vmem:[%s563] sm:$0xff]
    %v565 = vld [vmem:[%s563 + $0x8] sm:$0xff]
    %v566 = vld [vmem:[%s563 + $0x10] sm:$0xff]
    %v567 = vld [vmem:[%s563 + $0x18] sm:$0xff]
    %s568 = scalar_lea.vmem %s5, 1
    %v569 = vld [vmem:[%s568] sm:$0x1]
    %v571 = vlaneseq
    %v572 = vshrl.u32 %v571, 7
    %v573 = vsub.s32 0, %v572
    %v574 = vrot.slane %v569, %v573
    %v577 = vsel %vm100, %v562, 0
    %579 = vmatprep.subr.mxu0 0.0
    %580 = vmatpush1.msra.mxu0 0.0
    %581 = vmatprep.subr.mxu0 0.0
    %582 = vmatpush1.msra.mxu0 0.0
    %583 = vmatprep.subr.mxu0 0.0
    %584 = vmatpush1.msra.mxu0 0.0
    %585 = vmatprep.subr.mxu0 0.0
    %586 = vmatpush1.msra.mxu0 0.0
    %587 = vmatprep.subr.mxu0 0.0
    %588 = vmatpush1.msra.mxu0 0.0
    %589 = vmatprep.subr.mxu0 0.0
    %590 = vmatpush1.msra.mxu0 0.0
    %591 = vmatprep.subr.mxu0 0.0
    %592 = vmatpush1.msra.mxu0 0.0
    %593 = vmatprep.subr.mxu0 0.0
    %594 = vmatpush1.msra.mxu0 0.0
    %595 = vmatprep.subr.mxu0 0.0
    %596 = vmatpush1.msra.mxu0 0.0
    %597 = vmatprep.subr.mxu0 0.0
    %598 = vmatpush1.msra.mxu0 0.0
    %599 = vmatprep.subr.mxu0 0.0
    %600 = vmatpush1.msra.mxu0 0.0
    %601 = vmatprep.subr.mxu0 0.0
    %602 = vmatpush1.msra.mxu0 0.0
    %603 = vmatprep.subr.mxu0 0.0
    %604 = vmatpush1.msra.mxu0 %v567
    %605 = vmatprep.subr.mxu0 0.0
    %606 = vmatpush1.msra.mxu0 %v566
    %607 = vmatprep.subr.mxu0 0.0
    %608 = vmatpush1.msra.mxu0 %v565
    %609 = vmatprep.subr.mxu0 0.0
    %610 = vmatpush1.msra.mxu0 %v564
    %611 = vmatprep.subr.mxu0 0.0
    %612 = vmatpush2.msra.mxu0 0.0
    %613 = vmatprep.subr.mxu0 0.0
    %614 = vmatpush2.msra.mxu0 0.0
    %615 = vmatprep.subr.mxu0 0.0
    %616 = vmatpush2.msra.mxu0 0.0
    %617 = vmatprep.subr.mxu0 0.0
    %618 = vmatpush2.msra.mxu0 0.0
    %619 = vmatprep.subr.mxu0 0.0
    %620 = vmatpush2.msra.mxu0 0.0
    %621 = vmatprep.subr.mxu0 0.0
    %622 = vmatpush2.msra.mxu0 0.0
    %623 = vmatprep.subr.mxu0 0.0
    %624 = vmatpush2.msra.mxu0 0.0
    %625 = vmatprep.subr.mxu0 0.0
    %626 = vmatpush2.msra.mxu0 0.0
    %627 = vmatprep.subr.mxu0 0.0
    %628 = vmatpush2.msra.mxu0 0.0
    %629 = vmatprep.subr.mxu0 0.0
    %630 = vmatpush2.msra.mxu0 0.0
    %631 = vmatprep.subr.mxu0 0.0
    %632 = vmatpush2.msra.mxu0 0.0
    %633 = vmatprep.subr.mxu0 0.0
    %634 = vmatpush2.msra.mxu0 0.0
    %635 = vmatprep.subr.mxu0 0.0
    %636 = vmatpush2.msra.mxu0 0.0
    %637 = vmatprep.subr.mxu0 0.0
    %638 = vmatpush2.msra.mxu0 0.0
    %639 = vmatprep.subr.mxu0 0.0
    %640 = vmatpush2.msra.mxu0 0.0
    %641 = vmatprep.subr.mxu0 0.0
    %642 = vmatpush2.msra.mxu0 0.0
    %643 = vmatprep.mubr.f32.mxu0 0.0
    %644 = vmatmul.mubr.f32.gmra.mxu0 %v577
    %v645 = vpop.f32.mrf.mxu0
    %v646 = vadd.f32 %v574, %v645
    %v647 = vpop.f32.mrf.mxu0
    %648 = vdwg.mxu0
    %v649 = vtanh.pop %v646
    %s650 = scalar_lea.vmem [#allocation6], 64
    %v651 = vld [vmem:[%s650] sm:$0xff]
    %v652 = vld [vmem:[%s650 + $0x8] sm:$0xff]
    %v653 = vld [vmem:[%s650 + $0x10] sm:$0xff]
    %v654 = vld [vmem:[%s650 + $0x18] sm:$0xff]
    %s655 = scalar_lea.vmem %s5, 2
    %v656 = vld [vmem:[%s655] sm:$0x1]
    %v658 = vlaneseq
    %v659 = vshrl.u32 %v658, 7
    %v660 = vsub.s32 0, %v659
    %v661 = vrot.slane %v656, %v660
    %v664 = vsel %vm100, %v649, 0
    %666 = vmatprep.subr.mxu0 0.0
    %667 = vmatpush1.msra.mxu0 0.0
    %668 = vmatprep.subr.mxu0 0.0
    %669 = vmatpush1.msra.mxu0 0.0
    %670 = vmatprep.subr.mxu0 0.0
    %671 = vmatpush1.msra.mxu0 0.0
    %672 = vmatprep.subr.mxu0 0.0
    %673 = vmatpush1.msra.mxu0 0.0
    %674 = vmatprep.subr.mxu0 0.0
    %675 = vmatpush1.msra.mxu0 0.0
    %676 = vmatprep.subr.mxu0 0.0
    %677 = vmatpush1.msra.mxu0 0.0
    %678 = vmatprep.subr.mxu0 0.0
    %679 = vmatpush1.msra.mxu0 0.0
    %680 = vmatprep.subr.mxu0 0.0
    %681 = vmatpush1.msra.mxu0 0.0
    %682 = vmatprep.subr.mxu0 0.0
    %683 = vmatpush1.msra.mxu0 0.0
    %684 = vmatprep.subr.mxu0 0.0
    %685 = vmatpush1.msra.mxu0 0.0
    %686 = vmatprep.subr.mxu0 0.0
    %687 = vmatpush1.msra.mxu0 0.0
    %688 = vmatprep.subr.mxu0 0.0
    %689 = vmatpush1.msra.mxu0 0.0
    %690 = vmatprep.subr.mxu0 0.0
    %691 = vmatpush1.msra.mxu0 %v654
    %692 = vmatprep.subr.mxu0 0.0
    %693 = vmatpush1.msra.mxu0 %v653
    %694 = vmatprep.subr.mxu0 0.0
    %695 = vmatpush1.msra.mxu0 %v652
    %696 = vmatprep.subr.mxu0 0.0
    %697 = vmatpush1.msra.mxu0 %v651
    %698 = vmatprep.subr.mxu0 0.0
    %699 = vmatpush2.msra.mxu0 0.0
    %700 = vmatprep.subr.mxu0 0.0
    %701 = vmatpush2.msra.mxu0 0.0
    %702 = vmatprep.subr.mxu0 0.0
    %703 = vmatpush2.msra.mxu0 0.0
    %704 = vmatprep.subr.mxu0 0.0
    %705 = vmatpush2.msra.mxu0 0.0
    %706 = vmatprep.subr.mxu0 0.0
    %707 = vmatpush2.msra.mxu0 0.0
    %708 = vmatprep.subr.mxu0 0.0
    %709 = vmatpush2.msra.mxu0 0.0
    %710 = vmatprep.subr.mxu0 0.0
    %711 = vmatpush2.msra.mxu0 0.0
    %712 = vmatprep.subr.mxu0 0.0
    %713 = vmatpush2.msra.mxu0 0.0
    %714 = vmatprep.subr.mxu0 0.0
    %715 = vmatpush2.msra.mxu0 0.0
    %716 = vmatprep.subr.mxu0 0.0
    %717 = vmatpush2.msra.mxu0 0.0
    %718 = vmatprep.subr.mxu0 0.0
    %719 = vmatpush2.msra.mxu0 0.0
    %720 = vmatprep.subr.mxu0 0.0
    %721 = vmatpush2.msra.mxu0 0.0
    %722 = vmatprep.subr.mxu0 0.0
    %723 = vmatpush2.msra.mxu0 0.0
    %724 = vmatprep.subr.mxu0 0.0
    %725 = vmatpush2.msra.mxu0 0.0
    %726 = vmatprep.subr.mxu0 0.0
    %727 = vmatpush2.msra.mxu0 0.0
    %728 = vmatprep.subr.mxu0 0.0
    %729 = vmatpush2.msra.mxu0 0.0
    %730 = vmatprep.mubr.f32.mxu0 0.0
    %731 = vmatmul.mubr.f32.gmra.mxu0 %v664
    %v732 = vpop.f32.mrf.mxu0
    %v733 = vadd.f32 %v661, %v732
    %v734 = vpop.f32.mrf.mxu0
    %735 = vdwg.mxu0
    %v736 = vtanh.pop %v733
    %s737 = scalar_lea.vmem [#allocation6], 96
    %v738 = vld [vmem:[%s737] sm:$0xff]
    %v739 = vld [vmem:[%s737 + $0x8] sm:$0xff]
    %v740 = vld [vmem:[%s737 + $0x10] sm:$0xff]
    %v741 = vld [vmem:[%s737 + $0x18] sm:$0xff]
    %s742 = scalar_lea.vmem %s5, 3
    %v743 = vld [vmem:[%s742] sm:$0x1]
    %v745 = vlaneseq
    %v746 = vshrl.u32 %v745, 7
    %v747 = vsub.s32 0, %v746
    %v748 = vrot.slane %v743, %v747
    %v751 = vsel %vm100, %v736, 0
    %753 = vmatprep.subr.mxu0 0.0
    %754 = vmatpush1.msra.mxu0 0.0
    %755 = vmatprep.subr.mxu0 0.0
    %756 = vmatpush1.msra.mxu0 0.0
    %757 = vmatprep.subr.mxu0 0.0
    %758 = vmatpush1.msra.mxu0 0.0
    %759 = vmatprep.subr.mxu0 0.0
    %760 = vmatpush1.msra.mxu0 0.0
    %761 = vmatprep.subr.mxu0 0.0
    %762 = vmatpush1.msra.mxu0 0.0
    %763 = vmatprep.subr.mxu0 0.0
    %764 = vmatpush1.msra.mxu0 0.0
    %765 = vmatprep.subr.mxu0 0.0
    %766 = vmatpush1.msra.mxu0 0.0
    %767 = vmatprep.subr.mxu0 0.0
    %768 = vmatpush1.msra.mxu0 0.0
    %769 = vmatprep.subr.mxu0 0.0
    %770 = vmatpush1.msra.mxu0 0.0
    %771 = vmatprep.subr.mxu0 0.0
    %772 = vmatpush1.msra.mxu0 0.0
    %773 = vmatprep.subr.mxu0 0.0
    %774 = vmatpush1.msra.mxu0 0.0
    %775 = vmatprep.subr.mxu0 0.0
    %776 = vmatpush1.msra.mxu0 0.0
    %777 = vmatprep.subr.mxu0 0.0
    %778 = vmatpush1.msra.mxu0 %v741
    %779 = vmatprep.subr.mxu0 0.0
    %780 = vmatpush1.msra.mxu0 %v740
    %781 = vmatprep.subr.mxu0 0.0
    %782 = vmatpush1.msra.mxu0 %v739
    %783 = vmatprep.subr.mxu0 0.0
    %784 = vmatpush1.msra.mxu0 %v738
    %785 = vmatprep.subr.mxu0 0.0
    %786 = vmatpush2.msra.mxu0 0.0
    %787 = vmatprep.subr.mxu0 0.0
    %788 = vmatpush2.msra.mxu0 0.0
    %789 = vmatprep.subr.mxu0 0.0
    %790 = vmatpush2.msra.mxu0 0.0
    %791 = vmatprep.subr.mxu0 0.0
    %792 = vmatpush2.msra.mxu0 0.0
    %793 = vmatprep.subr.mxu0 0.0
    %794 = vmatpush2.msra.mxu0 0.0
    %795 = vmatprep.subr.mxu0 0.0
    %796 = vmatpush2.msra.mxu0 0.0
    %797 = vmatprep.subr.mxu0 0.0
    %798 = vmatpush2.msra.mxu0 0.0
    %799 = vmatprep.subr.mxu0 0.0
    %800 = vmatpush2.msra.mxu0 0.0
    %801 = vmatprep.subr.mxu0 0.0
    %802 = vmatpush2.msra.mxu0 0.0
    %803 = vmatprep.subr.mxu0 0.0
    %804 = vmatpush2.msra.mxu0 0.0
    %805 = vmatprep.subr.mxu0 0.0
    %806 = vmatpush2.msra.mxu0 0.0
    %807 = vmatprep.subr.mxu0 0.0
    %808 = vmatpush2.msra.mxu0 0.0
    %809 = vmatprep.subr.mxu0 0.0
    %810 = vmatpush2.msra.mxu0 0.0
    %811 = vmatprep.subr.mxu0 0.0
    %812 = vmatpush2.msra.mxu0 0.0
    %813 = vmatprep.subr.mxu0 0.0
    %814 = vmatpush2.msra.mxu0 0.0
    %815 = vmatprep.subr.mxu0 0.0
    %816 = vmatpush2.msra.mxu0 0.0
    %817 = vmatprep.mubr.f32.mxu0 0.0
    %818 = vmatmul.mubr.f32.gmra.mxu0 %v751
    %v819 = vpop.f32.mrf.mxu0
    %v820 = vadd.f32 %v748, %v819
    %v821 = vpop.f32.mrf.mxu0
    %822 = vdwg.mxu0
    %v823 = vstv %s69
    %v824 = vmul.f32 %v467, %v823
    %v825 = vstv %s70
    %v826 = vmul.f32 %v73, %v825
    %v827 = vadd.f32 %v824, %v826
    %v828 = vstv %s71
    %v829 = vadd.f32 %v827, %v828
    %v830 = vstv %s68
    %v831 = vmul.f32 %v830, %v829
    %s832 = ssub.f32 1.0, %s68
    %v833 = vstv %s832
    %v834 = vmul.f32 %v833, %v820
    %v835 = vadd.f32 %v831, %v834
    %837 = vset.pattern.permute.xlu0 0
    %838 = vperm.xlu0 %837, %v835
    %v839 = vpop.permute.xlu0 %838
    %v841 = vsel %vm470, %v839, 0.0
    %843 = vset.pattern.permute.xlu0 0
    %844 = vperm.xlu0 %843, %v462
    %v845 = vpop.permute.xlu0 %844
    %v847 = vsel %vm76, %v845, %v841
    %848 = vst [vmem:[#allocation9] sm:$0xff] %v847
    // Predicated region
    $region42: #{tpu_custom_call.1} parent=1 // pred_check
      _
    $region43: #{tpu_custom_call.1} parent=1 // pred_check_branch
      %850 = sbr.rel (0) target = $region45
    $region44: #{tpu_custom_call.1} parent=1 // pred_region
      %s852 = ssub.s32 128, 128
      %853 = vsyncadd [#allocation4], %s852
      %s855 = sshll.u32 [#allocation9], 4
      %s856 = int_to_ptr.vmem [resolvable:$true] %s855
      %858 = dma.vmem_to_hbm [thread:$0]  %s856, 128, %s7, [#allocation4]
    $region45: #{tpu_custom_call.1} parent=1 // pred_fallthru
      _
    // Predicated region
    $region46: #{tpu_custom_call.1} parent=1 // pred_check
      _
    $region47: #{tpu_custom_call.1} parent=1 // pred_check_branch
      %860 = sbr.rel (0) target = $region49
    $region48: #{tpu_custom_call.1} parent=1 // pred_region
      %861 = dma.done [#allocation4], 128
    $region49: #{tpu_custom_call.1} parent=1 // pred_fallthru
      _
    %862 = vsyncpa [#allocation3], 1
    %863 = vsyncpa [#allocation7], 1
    %864 = vsyncpa [#allocation4], 1
    %865 = vsyncpa [#allocation5], 1

</llo_original>
